<compile_context>
chip_gen: v7x
topology: tpu7x:2x2x1
jax: 0.10.0
libtpu: 0.0.40
codegen_flags: <defaults>
</compile_context>

<pallas_src>
import functools

import jax
import jax.numpy as jnp
from jax import lax
from jax.experimental import pallas as pl
from jax.experimental.pallas import tpu as pltpu


def _round_up(a, b):
    return ((a + b - 1) // b) * b


def _encoding_kernel(x_ref, ca_ref, cw_ref, e_ref, acc_ref, *,
                     mxu_dtype, n_valid, tile_n, ragged):
    """One (batch, N-tile) grid step.

        x   : (D, TN)        feature slab, native dtype == MXU dtype
        ca  : (K_pad, D+2)   fused operand [-2*s*C | s | s*||c||^2]
        cw  : (K_pad, D)     f32 codewords (finalize correction only)
        e   : (K_pad, D)     output encoding for this batch element
        acc : (K_pad, D+2)   f32 accumulator, persists across the N axis
    """
    n_idx = pl.program_id(1)

    @pl.when(n_idx == 0)
    def _init():
        acc_ref[...] = jnp.zeros_like(acc_ref)

    d = x_ref.shape[0]
    x = x_ref[...]                                          # (D, TN) native dtype
    xf = x.astype(jnp.float32)                              # no-op on the f32 path
    xsq = jnp.sum(xf * xf, axis=0, keepdims=True)           # (1, TN)  ||x_n||^2

    # Augmented tile, shared by both MXU pushes.
    xa = jnp.concatenate(
        [x, xsq.astype(mxu_dtype), jnp.ones((1, tile_n), mxu_dtype)],
        axis=0)                                             # (D+2, TN)

    # Scaled L2 logits in one MXU push: sl[k,n] = s_k * ||x_n - c_k||^2.
    sl = lax.dot_general(ca_ref[...], xa, (((1,), (0,)), ((), ())),
                         preferred_element_type=jnp.float32)        # (K_pad, TN)

    # Softmax over the codeword (sublane) axis, f32 throughout.
    m = jnp.max(sl, axis=0, keepdims=True)
    p = jnp.exp(sl - m)
    a = p * (1.0 / jnp.sum(p, axis=0, keepdims=True))                # (K_pad, TN)

    if ragged:
        # Zero the assignment weights of the zero-padded spatial columns.
        col = n_idx * tile_n + lax.broadcasted_iota(jnp.int32, (1, tile_n), 1)
        a = jnp.where(col < n_valid, a, 0.0)

    # Aggregation (contract over TN, trans_b): columns [:D] accumulate A @ X^T,
    # column D+1 (the ones row) accumulates sum_n a[k,n] for free on the MXU.
    acc_ref[...] += lax.dot_general(a.astype(mxu_dtype), xa,
                                    (((1,), (1,)), ((), ())),
                                    preferred_element_type=jnp.float32)

    @pl.when(n_idx == pl.num_programs(1) - 1)
    def _finalize():
        acc = acc_ref[...]
        e = acc[:, :d] - acc[:, d + 1:d + 2] * cw_ref[...]
        e_ref[...] = e.astype(e_ref.dtype)


def _pick_tile_n(n, d, k_pad, mxu_itemsize, budget_bytes=20 * 1024 * 1024):
    """Largest 128-multiple tile whose real per-step VMEM footprint fits budget."""
    per_col = (2 * d * mxu_itemsize          # double-buffered input tile
               + (d + 2) * mxu_itemsize      # augmented Xa copy
               + 6 * k_pad * 4               # sl / p / a f32 temporaries (+ slack)
               + 96)
    n128 = _round_up(n, 128)
    for cand in (8192, 4096, 2048, 1024, 512, 256, 128):
        if n128 % cand == 0 and cand * per_col <= budget_bytes:
            return cand
    return 128


def encoding_forward(x, codewords, scale, *, use_bf16_mxu=None):
    """Pallas implementation of Encoding.forward.

    Accepts NCHW input (B, D, H, W) or 3D (B, D, N); returns (B, K, D).
    use_bf16_mxu=None infers from x.dtype; True casts the stream to bf16
    (softmax/accumulation stay f32) — valid on v5e/v6e/v7x.
    """
    orig_dtype = x.dtype
    if x.ndim == 4:
        b, d, h, w = x.shape
        n = h * w
        x_bdn = x.reshape(b, d, n)               # free reshape; no HBM transpose
    elif x.ndim == 3:
        b, d, n = x.shape
        x_bdn = x
    else:
        raise ValueError("Encoding layer: input must be (B,D,N) or (B,D,H,W)")

    k, dc = codewords.shape
    assert dc == d, "codeword dim must match feature channels"

    if use_bf16_mxu is None:
        use_bf16_mxu = (orig_dtype == jnp.bfloat16)
    mxu_dtype = jnp.bfloat16 if use_bf16_mxu else jnp.float32
    # TODO(synk): biggest roofline win is when the upstream layer already writes x
    # in bf16 so this cast disappears; the kernel consumes the stream natively.
    x_bdn = x_bdn.astype(mxu_dtype)

    k_pad = _round_up(k, 8)
    tn = _pick_tile_n(n, d, k_pad, jnp.dtype(mxu_dtype).itemsize)
    n_pad = _round_up(n, tn)
    ragged = n_pad != n
    if ragged:
        x_bdn = jnp.pad(x_bdn, ((0, 0), (0, 0), (0, n_pad - n)))
    n_tiles = n_pad // tn

    # Fused codeword operand: Ca = [-2*s*C | s | s*||c||^2], plus f32 codewords
    # for the finalize correction.  Pad K rows get -1e30 logits (softmax -> 0).
    c32 = codewords.astype(jnp.float32)
    s32 = scale.astype(jnp.float32).reshape(k, 1)
    ca = jnp.concatenate(
        [-2.0 * s32 * c32, s32, s32 * jnp.sum(c32 * c32, axis=1, keepdims=True)],
        axis=1)                                  # (K, D+2)
    cwf = c32
    if k_pad != k:
        pad_rows = jnp.zeros((k_pad - k, d + 2), jnp.float32)
        pad_rows = pad_rows.at[:, d + 1].set(jnp.float32(-1e30))
        ca = jnp.concatenate([ca, pad_rows], axis=0)
        cwf = jnp.concatenate([cwf, jnp.zeros((k_pad - k, d), jnp.float32)], axis=0)
    ca = ca.astype(mxu_dtype)

    kernel = functools.partial(_encoding_kernel, mxu_dtype=mxu_dtype,
                               n_valid=n, tile_n=tn, ragged=ragged)

    x_spec_kwargs = {}
    if tn <= 256 and n_tiles >= 4:
        # Small-tile regime: deepen buffering to hide per-step DMA issue latency.
        x_spec_kwargs["pipeline_mode"] = pl.Buffered(3)

    cost = pl.CostEstimate(
        flops=4 * b * k_pad * (d + 2) * n_pad + 6 * b * k_pad * n_pad,
        transcendentals=b * k_pad * n_pad,
        bytes_accessed=(x_bdn.size * x_bdn.dtype.itemsize
                        + ca.size * ca.dtype.itemsize
                        + cwf.size * cwf.dtype.itemsize
                        + b * k_pad * d * jnp.dtype(orig_dtype).itemsize),
    )

    out = pl.pallas_call(
        kernel,
        out_shape=jax.ShapeDtypeStruct((b, k_pad, d), orig_dtype),
        grid_spec=pltpu.PrefetchScalarGridSpec(
            num_scalar_prefetch=0,
            grid=(b, n_tiles),
            in_specs=[
                # per-(batch, N-tile) feature slab; batch dim squeezed out
                pl.BlockSpec((None, d, tn), lambda bi, ni: (bi, 0, ni),
                             **x_spec_kwargs),
                # fused codeword operand / f32 codewords: fetched once, resident
                pl.BlockSpec((k_pad, d + 2), lambda bi, ni: (0, 0)),
                pl.BlockSpec((k_pad, d), lambda bi, ni: (0, 0)),
            ],
            out_specs=pl.BlockSpec((None, k_pad, d), lambda bi, ni: (bi, 0, 0)),
            scratch_shapes=[pltpu.VMEM((k_pad, d + 2), jnp.float32)],
        ),
        compiler_params=pltpu.CompilerParams(
            dimension_semantics=("parallel", "arbitrary"),
            vmem_limit_bytes=48 * 1024 * 1024,
        ),
        cost_estimate=cost,
    )(x_bdn, ca, cwf)

    # TODO(synk): on v7x with B == 1, split the N-tile axis across the two
    # TensorCores (grid (B, 2, n_tiles//2), middle axis "parallel", two partial
    # accumulators summed by a final add) to avoid leaving one core idle.

    return out[:, :k, :] if k_pad != k else out


def encoding_reference(x_nchw, codewords, scale):
    """Pure-JAX reference mirroring the PyTorch semantics."""
    bb, dd, hh, ww = x_nchw.shape
    xr = jnp.transpose(x_nchw.reshape(bb, dd, hh * ww), (0, 2, 1))   # (B, N, D)
    resid = xr[:, :, None, :] - codewords[None, None, :, :]          # (B, N, K, D)
    sl = scale[None, None, :] * jnp.sum(resid * resid, axis=-1)      # (B, N, K)
    a = jax.nn.softmax(sl, axis=2)                                   # (B, N, K)
    e = jnp.sum(a[..., None] * resid, axis=1)                        # (B, K, D)
    return e


if __name__ == "__main__":
    # Small shapes consistent with the module: B=2, D(channels)=32, H=W=16, K=8.
    B, D, H, W, K = 2, 32, 16, 16, 8

    key = jax.random.PRNGKey(0)
    kx, kc, ks, kx2 = jax.random.split(key, 4)

    # deterministic "reset_params": codewords ~ U(-std1, std1), scale ~ U(-1, 0)
    std1 = 1.0 / (K * D) ** 0.5
    codewords = jax.random.uniform(kc, (K, D), jnp.float32, minval=-std1, maxval=std1)
    scale = jax.random.uniform(ks, (K,), jnp.float32, minval=-1.0, maxval=0.0)

    # 1) aligned spatial size (N = 256), exact f32 path
    x = jax.random.uniform(kx, (B, D, H, W), jnp.float32, minval=-0.5, maxval=0.5)
    e_pallas = jax.block_until_ready(encoding_forward(x, codewords, scale))
    e_ref = jax.block_until_ready(encoding_reference(x, codewords, scale))
    assert e_pallas.shape == (B, K, D)
    assert jnp.allclose(e_pallas, e_ref, atol=2e-3, rtol=2e-3), "aligned mismatch"

    # 2) ragged spatial size (N = 225): exercises zero-padding + in-kernel masking
    x2 = jax.random.uniform(kx2, (B, D, 15, 15), jnp.float32, minval=-0.5, maxval=0.5)
    e2_pallas = jax.block_until_ready(encoding_forward(x2, codewords, scale))
    e2_ref = jax.block_until_ready(encoding_reference(x2, codewords, scale))
    assert e2_pallas.shape == (B, K, D)
    assert jnp.allclose(e2_pallas, e2_ref, atol=2e-3, rtol=2e-3), "ragged mismatch"

    print("KERNEL_OK")
</pallas_src>

<mosaic_0001>
module attributes {stable_mosaic.version = 11 : i64} {
  func.func @_encoding_kernel(%arg0: i32, %arg1: i32, %arg2: memref<1x32x256xf32, #tpu.memory_space<vmem>>, %arg3: memref<8x34xf32, #tpu.memory_space<vmem>>, %arg4: memref<8x32xf32, #tpu.memory_space<vmem>>, %arg5: memref<1x8x32xf32, #tpu.memory_space<vmem>>, %arg6: memref<8x34xf32, #tpu.memory_space<vmem>>) attributes {dimension_semantics = [#tpu.dimension_semantics<parallel>, #tpu.dimension_semantics<arbitrary>], iteration_bounds = array<i64: 2, 1>, scalar_prefetch = 0 : i64, scratch_operands = 1 : i64, tpu.core_type = #tpu.core_type<tc>, window_params = [{transform_indices = @transform_0, window_bounds = array<i64: 1, 32, 256>}, {pipeline_mode = #tpu.pipeline_mode<synchronous>, transform_indices = @transform_1, window_bounds = array<i64: 8, 34>}, {pipeline_mode = #tpu.pipeline_mode<synchronous>, transform_indices = @transform_2, window_bounds = array<i64: 8, 32>}, {transform_indices = @transform_3, window_bounds = array<i64: 1, 8, 32>}]} {
    %c0_i32 = arith.constant 0 : i32
    %0 = arith.cmpi eq, %arg1, %c0_i32 : i32
    %1 = arith.extui %0 : i1 to i32
    %c0_i32_0 = arith.constant 0 : i32
    %2 = arith.cmpi ne, %1, %c0_i32_0 : i32
    scf.if %2 {
      %cst_17 = arith.constant 0.000000e+00 : f32
      %30 = vector.broadcast %cst_17 : f32 to vector<8x34xf32>
      %c0_18 = arith.constant 0 : index
      %c0_19 = arith.constant 0 : index
      %31 = vector.load %arg6[%c0_18, %c0_19] : memref<8x34xf32, #tpu.memory_space<vmem>>, vector<8x34xf32>
      tpu.vector_store %arg6[%c0_18, %c0_19], %30 {strides = array<i32>} : memref<8x34xf32, #tpu.memory_space<vmem>>, vector<8x34xf32>,
    } else {
    }
    %c0 = arith.constant 0 : index
    %c0_1 = arith.constant 0 : index
    %c0_2 = arith.constant 0 : index
    %3 = vector.load %arg2[%c0, %c0_1, %c0_2] : memref<1x32x256xf32, #tpu.memory_space<vmem>>, vector<1x32x256xf32>
    %4 = vector.shape_cast %3 : vector<1x32x256xf32> to vector<32x256xf32>
    %5 = arith.mulf %4, %4 : vector<32x256xf32>
    %cst = arith.constant dense<0.000000e+00> : vector<256xf32>
    %6 = vector.multi_reduction <add>, %5, %cst [0] : vector<32x256xf32> to vector<256xf32>
    %7 = vector.shape_cast %6 : vector<256xf32> to vector<1x256xf32>
    %cst_3 = arith.constant 1.000000e+00 : f32
    %8 = vector.broadcast %cst_3 : f32 to vector<1x256xf32>
    %9 = tpu.concatenate %4, %7, %8 in 0 : vector<32x256xf32>, vector<1x256xf32>, vector<1x256xf32> -> vector<34x256xf32>
    %c0_4 = arith.constant 0 : index
    %c0_5 = arith.constant 0 : index
    %10 = vector.load %arg3[%c0_4, %c0_5] : memref<8x34xf32, #tpu.memory_space<vmem>>, vector<8x34xf32>
    %cst_6 = arith.constant dense<0.000000e+00> : vector<8x256xf32>
    %11 = tpu.matmul %10, %9, %cst_6 {dimension_numbers = #tpu.dot_dimension_numbers<[1], [0], [0], [1], [0, 0, 1, 1], [], []>} : vector<8x34xf32>, vector<34x256xf32>, vector<8x256xf32> -> vector<8x256xf32>
    %cst_7 = arith.constant dense<0xFF800000> : vector<256xf32>
    %12 = vector.multi_reduction <maximumf>, %11, %cst_7 [0] : vector<8x256xf32> to vector<256xf32>
    %13 = vector.shape_cast %12 : vector<256xf32> to vector<1x256xf32>
    %14 = vector.broadcast %13 : vector<1x256xf32> to vector<8x256xf32>
    %15 = arith.subf %11, %14 : vector<8x256xf32>
    %16 = math.exp %15 : vector<8x256xf32>
    %cst_8 = arith.constant dense<0.000000e+00> : vector<256xf32>
    %17 = vector.multi_reduction <add>, %16, %cst_8 [0] : vector<8x256xf32> to vector<256xf32>
    %18 = vector.shape_cast %17 : vector<256xf32> to vector<1x256xf32>
    %cst_9 = arith.constant 1.000000e+00 : f32
    %19 = vector.broadcast %cst_9 : f32 to vector<1x256xf32>
    %20 = arith.divf %19, %18 : vector<1x256xf32>
    %21 = vector.broadcast %20 : vector<1x256xf32> to vector<8x256xf32>
    %22 = arith.mulf %16, %21 : vector<8x256xf32>
    %c0_10 = arith.constant 0 : index
    %c0_11 = arith.constant 0 : index
    %23 = vector.load %arg6[%c0_10, %c0_11] : memref<8x34xf32, #tpu.memory_space<vmem>>, vector<8x34xf32>
    %cst_12 = arith.constant dense<0.000000e+00> : vector<8x34xf32>
    %24 = tpu.matmul %22, %9, %cst_12 {dimension_numbers = #tpu.dot_dimension_numbers<[1], [1], [0], [0], [0, 0, 1, 0], [], []>} : vector<8x256xf32>, vector<34x256xf32>, vector<8x34xf32> -> vector<8x34xf32>
    %25 = arith.addf %23, %24 : vector<8x34xf32>
    %c0_13 = arith.constant 0 : index
    %c0_14 = arith.constant 0 : index
    %26 = vector.load %arg6[%c0_13, %c0_14] : memref<8x34xf32, #tpu.memory_space<vmem>>, vector<8x34xf32>
    tpu.vector_store %arg6[%c0_13, %c0_14], %25 {strides = array<i32>} : memref<8x34xf32, #tpu.memory_space<vmem>>, vector<8x34xf32>,
    %c0_i32_15 = arith.constant 0 : i32
    %27 = arith.cmpi eq, %arg1, %c0_i32_15 : i32
    %28 = arith.extui %27 : i1 to i32
    %c0_i32_16 = arith.constant 0 : i32
    %29 = arith.cmpi ne, %28, %c0_i32_16 : i32
    scf.if %29 {
      %c0_17 = arith.constant 0 : index
      %c0_18 = arith.constant 0 : index
      %30 = vector.load %arg6[%c0_17, %c0_18] : memref<8x34xf32, #tpu.memory_space<vmem>>, vector<8x34xf32>
      %31 = vector.extract_strided_slice %30 {offsets = [0, 0], sizes = [8, 32], strides = [1, 1]} : vector<8x34xf32> to vector<8x32xf32>
      %32 = vector.extract_strided_slice %30 {offsets = [0, 33], sizes = [8, 1], strides = [1, 1]} : vector<8x34xf32> to vector<8x1xf32>
      %c0_19 = arith.constant 0 : index
      %c0_20 = arith.constant 0 : index
      %33 = vector.load %arg4[%c0_19, %c0_20] : memref<8x32xf32, #tpu.memory_space<vmem>>, vector<8x32xf32>
      %34 = vector.broadcast %32 : vector<8x1xf32> to vector<8x32xf32>
      %35 = arith.mulf %34, %33 : vector<8x32xf32>
      %36 = arith.subf %31, %35 : vector<8x32xf32>
      %c0_21 = arith.constant 0 : index
      %c0_22 = arith.constant 0 : index
      %c0_23 = arith.constant 0 : index
      %37 = vector.load %arg5[%c0_21, %c0_22, %c0_23] : memref<1x8x32xf32, #tpu.memory_space<vmem>>, vector<1x8x32xf32>
      %38 = vector.shape_cast %37 : vector<1x8x32xf32> to vector<8x32xf32>
      %39 = vector.shape_cast %36 : vector<8x32xf32> to vector<1x8x32xf32>
      tpu.vector_store %arg5[%c0_21, %c0_22, %c0_23], %39 {strides = array<i32>} : memref<1x8x32xf32, #tpu.memory_space<vmem>>, vector<1x8x32xf32>,
    } else {
    }
    return
  }
  func.func @transform_0(%arg0: i32, %arg1: i32) -> (i32, i32, i32) {
    %c0_i32 = arith.constant 0 : i32
    %c0_i32_0 = arith.constant 0 : i32
    return %arg0, %c0_i32, %arg1 : i32, i32, i32
  }
  func.func @transform_1(%arg0: i32, %arg1: i32) -> (i32, i32) {
    %c0_i32 = arith.constant 0 : i32
    %c0_i32_0 = arith.constant 0 : i32
    %c0_i32_1 = arith.constant 0 : i32
    return %c0_i32, %c0_i32_0 : i32, i32
  }
  func.func @transform_2(%arg0: i32, %arg1: i32) -> (i32, i32) {
    %c0_i32 = arith.constant 0 : i32
    %c0_i32_0 = arith.constant 0 : i32
    %c0_i32_1 = arith.constant 0 : i32
    return %c0_i32, %c0_i32_0 : i32, i32
  }
  func.func @transform_3(%arg0: i32, %arg1: i32) -> (i32, i32, i32) {
    %c0_i32 = arith.constant 0 : i32
    %c0_i32_0 = arith.constant 0 : i32
    %c0_i32_1 = arith.constant 0 : i32
    return %arg0, %c0_i32, %c0_i32_0 : i32, i32, i32
  }
}

</mosaic_0001>

<llo_original>
// kernel: tpu_custom_call.1
$region0: #{tpu_custom_call.1}
  #allocation0 [shape = 'u32[]', space=smem, size = 0x4, offset = 0x4, fixed_abs, tag = 'smem constant byte address 0x4 - core index']
  #allocation1 [shape = 'u32[144,128]{1,0:T(1,128)}', space=vmem, size = 0x12000, scoped, tag = 'internal scratch']
  #allocation2 [shape = 'f32[8,34]{1,0:T(8,128)}', space=vmem, size = 0x1000, scoped, tag = 'scratch operand']
  %s0 = inlined_call_operand.hbm [shape: f32[2,32,256], index: 0, kind: input, shape index: {}]
  %s1 = inlined_call_operand.hbm [shape: f32[8,34], index: 1, kind: input, shape index: {}]
  %s2 = inlined_call_operand.hbm [shape: f32[8,32], index: 2, kind: input, shape index: {}]
  %s3 = inlined_call_operand.hbm [shape: f32[2,8,32], index: 3, kind: output, shape index: {}]
  %s4 = sld [smem:[#allocation0]]
  $region65: #{tpu_custom_call.1} parent=0
    _
  %s6 = ssub.s32 1, %s4
  %s7 = scalar_select 0, %s6, %s4
  $region1: #{tpu_custom_call.1} parent=0
    #allocation3 [shape = 'u8[65536]{0}', space=vmem, size = 0x10000, scoped, tag = 'input window, operand 0']
    #allocation4 [shape = 's32[2]{0}', space=sflag, size = 0x8, scoped, tag = 'scoped memory for tpu_custom_call.1']
    #allocation5 [shape = 's32[2]{0}', space=sflag, size = 0x8, scoped, tag = 'scoped memory for tpu_custom_call.1']
    #allocation6 [shape = 'u8[4096]{0}', space=vmem, size = 0x1000, scoped, tag = 'input window, operand 1, single buffered']
    #allocation7 [shape = 's32[1]{0}', space=sflag, size = 0x4, scoped, tag = 'scoped memory for tpu_custom_call.1']
    #allocation8 [shape = 'u8[4096]{0}', space=vmem, size = 0x1000, scoped, tag = 'input window, operand 2, single buffered']
    #allocation9 [shape = 'u8[8192]{0}', space=vmem, size = 0x2000, scoped, tag = 'output window, operand 0']
    %8 = vsyncpa [#allocation4], 0
    %s9 = scalar_lea.sflag [#allocation4], 1
    %10 = vsyncpa %s9, 0
    %11 = vsyncpa [#allocation7], 0
    %12 = vsyncpa [#allocation5], 0
    %s13 = scalar_lea.sflag [#allocation5], 1
    %14 = vsyncpa %s13, 0
    loop: start=0, step=1, limit=4
    $region2: #{tpu_custom_call.1} parent=1 // loop_pre_header
      _
    $region3: #{tpu_custom_call.1} parent=1 // loop_header
      %s16 = sphi 0, %s20
      %p17 = scmp.ge.s32.totalorder %s16, 4
      %s23 = sphi 0, %s35
      %s24 = sphi 0, %s31
      %s25 = sphi 0, %s23
      %s26 = sphi 0, %s24
      %s27 = sphi 0, %s25
      %s28 = sphi 0, %s26
      %s40 = sphi 0, %s42
      %s43 = sphi 0, %s40
      %s44 = sphi 0, %s43
      %s60 = sphi 0, %s44
      %s64 = sphi 0, %s64
      %s66 = sphi 0, %s64
      %s67 = sphi 0, %s66
      %s81 = sphi 0, %s67
      %s85 = sphi 0, %s85
      %s87 = sphi 0, %s85
      %s88 = sphi 0, %s87
      %s102 = sphi 0, %s88
      %s108 = sphi 0, %s110
      %s111 = sphi 0, %s108
      %s112 = sphi 0, %s111
      %s128 = sphi 0, %s112
    $region4: #{tpu_custom_call.1} parent=1 // loop_header_branch
      %19 = sbr.rel (%p17) target = $region8
    $region5: #{tpu_custom_call.1} parent=1 // loop_body
      %s21 = ssub.s32 %s16, 1
      %s22 = ssub.s32 %s16, 2
      %s29 = sadd.s32 1, %s24
      %p30 = scmp.ge.s32.totalorder %s29, 1
      %s31 = scalar_select %p30, 0, %s29
      %s32 = sadd.s32 1, %s23
      %s33 = scalar_select %p30, %s32, %s23
      %p34 = scmp.ge.s32.totalorder %s33, 2
      %s35 = scalar_select %p34, 0, %s33
      %s36 = ssub.s32 %s23, %s35
      %s37 = ssub.s32 %s24, %s31
      %s38 = sor.u32 %s36, %s37
      %p39 = scmp.eq.s32.totalorder %s38, 0
      %s41 = sadd.s32 %s40, 1
      %s42 = scalar_select %p39, %s40, %s41
      %p45 = pneg %p39
      %p46 = scmp.eq.s32.totalorder %s16, 1
      %p47 = por %p45, %p46
      %p48 = scmp.ne.s32.totalorder %s40, %s43
      %p49 = scmp.eq.s32.totalorder %s16, 0
      %p50 = por %p48, %p49
      %p51 = scmp.ne.s32.totalorder %s40, %s43
      %p52 = scmp.eq.s32.totalorder %s21, 1
      %p53 = por %p51, %p52
      %p54 = scmp.ne.s32.totalorder %s43, %s44
      %p55 = scmp.eq.s32.totalorder %s21, 0
      %p56 = por %p54, %p55
      %p57 = scmp.ne.s32.totalorder %s43, %s44
      %p58 = scmp.eq.s32.totalorder %s22, 1
      %p59 = por %p57, %p58
      %p61 = scmp.ne.s32.totalorder %s44, %s60
      %p62 = scmp.eq.s32.totalorder %s22, 0
      %p63 = por %p61, %p62
      %s65 = sadd.s32 %s64, 1
      %p68 = scmp.eq.s32.totalorder %s16, 1
      %p69 = scmp.ne.s32.totalorder %s64, %s66
      %p70 = scmp.eq.s32.totalorder %s16, 0
      %p71 = por %p69, %p70
      %p72 = scmp.ne.s32.totalorder %s64, %s66
      %p73 = scmp.eq.s32.totalorder %s21, 1
      %p74 = por %p72, %p73
      %p75 = scmp.ne.s32.totalorder %s66, %s67
      %p76 = scmp.eq.s32.totalorder %s21, 0
      %p77 = por %p75, %p76
      %p78 = scmp.ne.s32.totalorder %s66, %s67
      %p79 = scmp.eq.s32.totalorder %s22, 1
      %p80 = por %p78, %p79
      %p82 = scmp.ne.s32.totalorder %s67, %s81
      %p83 = scmp.eq.s32.totalorder %s22, 0
      %p84 = por %p82, %p83
      %s86 = sadd.s32 %s85, 1
      %p89 = scmp.eq.s32.totalorder %s16, 1
      %p90 = scmp.ne.s32.totalorder %s85, %s87
      %p91 = scmp.eq.s32.totalorder %s16, 0
      %p92 = por %p90, %p91
      %p93 = scmp.ne.s32.totalorder %s85, %s87
      %p94 = scmp.eq.s32.totalorder %s21, 1
      %p95 = por %p93, %p94
      %p96 = scmp.ne.s32.totalorder %s87, %s88
      %p97 = scmp.eq.s32.totalorder %s21, 0
      %p98 = por %p96, %p97
      %p99 = scmp.ne.s32.totalorder %s87, %s88
      %p100 = scmp.eq.s32.totalorder %s22, 1
      %p101 = por %p99, %p100
      %p103 = scmp.ne.s32.totalorder %s88, %s102
      %p104 = scmp.eq.s32.totalorder %s22, 0
      %p105 = por %p103, %p104
      %s106 = ssub.s32 %s23, %s35
      %p107 = scmp.eq.s32.totalorder %s106, 0
      %s109 = sadd.s32 %s108, 1
      %s110 = scalar_select %p107, %s108, %s109
      %p113 = pneg %p107
      %p114 = scmp.eq.s32.totalorder %s16, 1
      %p115 = por %p113, %p114
      %p116 = scmp.ne.s32.totalorder %s108, %s111
      %p117 = scmp.eq.s32.totalorder %s16, 0
      %p118 = por %p116, %p117
      %p119 = scmp.ne.s32.totalorder %s108, %s111
      %p120 = scmp.eq.s32.totalorder %s21, 1
      %p121 = por %p119, %p120
      %p122 = scmp.ne.s32.totalorder %s111, %s112
      %p123 = scmp.eq.s32.totalorder %s21, 0
      %p124 = por %p122, %p123
      %p125 = scmp.ne.s32.totalorder %s111, %s112
      %p126 = scmp.eq.s32.totalorder %s22, 1
      %p127 = por %p125, %p126
      %p129 = scmp.ne.s32.totalorder %s112, %s128
      %p130 = scmp.eq.s32.totalorder %s22, 0
      %p131 = por %p129, %p130
      %p132 = scmp.le.s32.totalorder 1, %s16
      %p133 = scmp.lt.s32.totalorder %s16, 3
      %p134 = pnand %p132, %p133
      %p135 = pneg %p134
      // Predicated region
      $region9: #{tpu_custom_call.1} parent=5 // pred_check
        _
      $region10: #{tpu_custom_call.1} parent=5 // pred_check_branch
        %137 = sbr.rel (%p134) target = $region12
      $region11: #{tpu_custom_call.1} parent=5 // pred_region
        %s138 = ssub.s32 %s16, 1
        // Predicated region
        $region13: #{tpu_custom_call.1} parent=11 // pred_check
          %p139 = pneg %p77
        $region14: #{tpu_custom_call.1} parent=11 // pred_check_branch
          %141 = sbr.rel (%p139) target = $region16
        $region15: #{tpu_custom_call.1} parent=11 // pred_region
          %s143 = ssub.s32 128, 128
          %144 = vsyncadd [#allocation7], %s143
          %s146 = sshll.u32 [#allocation6], 4
          %s147 = int_to_ptr.vmem [resolvable:$true] %s146
          %149 = dma.hbm_to_vmem [thread:$0]  %s1, 128, %s147, [#allocation7]
        $region16: #{tpu_custom_call.1} parent=11 // pred_fallthru
          _
        // Predicated region
        $region17: #{tpu_custom_call.1} parent=11 // pred_check
          %p150 = pneg %p98
        $region18: #{tpu_custom_call.1} parent=11 // pred_check_branch
          %152 = sbr.rel (%p150) target = $region20
        $region19: #{tpu_custom_call.1} parent=11 // pred_region
          %s154 = ssub.s32 128, 128
          %155 = vsyncadd [#allocation7], %s154
          %s157 = sshll.u32 [#allocation8], 4
          %s158 = int_to_ptr.vmem [resolvable:$true] %s157
          %160 = dma.hbm_to_vmem [thread:$0]  %s2, 128, %s158, [#allocation7]
        $region20: #{tpu_custom_call.1} parent=11 // pred_fallthru
          _
      $region12: #{tpu_custom_call.1} parent=5 // pred_fallthru
        _
      %p161 = scmp.lt.s32.totalorder %s16, 2
      // Predicated region
      $region21: #{tpu_custom_call.1} parent=5 // pred_check
        %p162 = pneg %p161
      $region22: #{tpu_custom_call.1} parent=5 // pred_check_branch
        %164 = sbr.rel (%p162) target = $region24
      $region23: #{tpu_custom_call.1} parent=5 // pred_region
        // Predicated region
        $region25: #{tpu_custom_call.1} parent=23 // pred_check
          %p165 = pneg %p50
        $region26: #{tpu_custom_call.1} parent=23 // pred_check_branch
          %167 = sbr.rel (%p165) target = $region28
        $region27: #{tpu_custom_call.1} parent=23 // pred_region
          %s168 = sand.u32 %s40, 1
          %s169 = scalar_lea.sflag [#allocation4], %s168
          %s170 = sand.u32 %s40, 1
          %s171 = smul.addr %s170, 64
          %s172 = scalar_lea.vmem [#allocation3], %s171
          %s173 = smul.u32 2, %s24
          %s175 = ssub.s32 1024, 1024
          %176 = vsyncadd %s169, %s175
          %s177 = smul.addr %s23, 8
          %s178 = sadd.s32 %s173, %s177
          %s179 = smul.addr %s178, 128
          %s180 = scalar_lea.hbm %s0, %s179
          %s181 = sshll.u32 %s172, 4
          %s182 = int_to_ptr.vmem [resolvable:$true] %s181
          %187 = dma.hbm_to_vmem [thread:$0]  %s180, 1024, %s182, %s169, 256, 256, 16
        $region28: #{tpu_custom_call.1} parent=23 // pred_fallthru
          _
      $region24: #{tpu_custom_call.1} parent=5 // pred_fallthru
        _
      %p188 = scmp.le.s32.totalorder 1, %s16
      %p189 = scmp.lt.s32.totalorder %s16, 3
      %p190 = pnand %p188, %p189
      %p191 = pneg %p190
      // Predicated region
      $region29: #{tpu_custom_call.1} parent=5 // pred_check
        _
      $region30: #{tpu_custom_call.1} parent=5 // pred_check_branch
        %193 = sbr.rel (%p190) target = $region32
      $region31: #{tpu_custom_call.1} parent=5 // pred_region
        %s194 = ssub.s32 %s16, 1
        %s195 = sand.u32 %s43, 1
        %s196 = scalar_lea.sflag [#allocation4], %s195
        %s197 = sand.u32 %s43, 1
        %s198 = smul.addr %s197, 64
        %s199 = scalar_lea.vmem [#allocation3], %s198
        // Predicated region
        $region33: #{tpu_custom_call.1} parent=31 // pred_check
          %p200 = pneg %p56
        $region34: #{tpu_custom_call.1} parent=31 // pred_check_branch
          %202 = sbr.rel (%p200) target = $region36
        $region35: #{tpu_custom_call.1} parent=31 // pred_region
          %203 = dma.done %s196, 1024
        $region36: #{tpu_custom_call.1} parent=31 // pred_fallthru
          _
        // Predicated region
        $region37: #{tpu_custom_call.1} parent=31 // pred_check
          %p204 = pneg %p77
        $region38: #{tpu_custom_call.1} parent=31 // pred_check_branch
          %206 = sbr.rel (%p204) target = $region40
        $region39: #{tpu_custom_call.1} parent=31 // pred_region
          %207 = dma.done [#allocation7], 128
        $region40: #{tpu_custom_call.1} parent=31 // pred_fallthru
          _
        // Predicated region
        $region41: #{tpu_custom_call.1} parent=31 // pred_check
          %p208 = pneg %p98
        $region42: #{tpu_custom_call.1} parent=31 // pred_check_branch
          %210 = sbr.rel (%p208) target = $region44
        $region43: #{tpu_custom_call.1} parent=31 // pred_region
          %211 = dma.done [#allocation7], 128
        $region44: #{tpu_custom_call.1} parent=31 // pred_fallthru
          _
        %s212 = sand.u32 %s43, 1
        %s213 = scalar_lea.sflag [#allocation4], %s212
        %s214 = sand.u32 %s43, 1
        %s215 = smul.addr %s214, 64
        %s216 = scalar_lea.vmem [#allocation3], %s215
        %p217 = pneg %p56
        %p218 = pneg %p53
        %p219 = pneg %p77
        %p220 = pneg %p74
        %p221 = pneg %p98
        %p222 = pneg %p95
        %p223 = pneg %p124
        %p224 = pneg %p121
        %s225 = sand.u32 %s111, 1
        %s226 = scalar_lea.sflag [#allocation5], %s225
        %s227 = sand.u32 %s111, 1
        %s228 = smul.addr %s227, 8
        %s229 = scalar_lea.vmem [#allocation9], %s228
        %s230 = smul.u32 2, %s26
        %p231 = scmp.eq.s32.totalorder %s26, 0
        // Predicated region
        $region45: #{tpu_custom_call.1} parent=31 // pred_check
          %p232 = pneg %p231
        $region46: #{tpu_custom_call.1} parent=31 // pred_check_branch
          %234 = sbr.rel (%p232) target = $region48
        $region47: #{tpu_custom_call.1} parent=31 // pred_region
          %vm235 = vcmask 277504
          %236 = vst.msk [vmem:[#allocation2] sm:$0xff] %vm235, 0.0
        $region48: #{tpu_custom_call.1} parent=31 // pred_fallthru
          _
        %v237 = vld [vmem:[%s199] sm:$0xff]
        %v238 = vld [vmem:[%s199 + $0x8] sm:$0xff]
        %v239 = vld [vmem:[%s199 + $0x10] sm:$0xff]
        %v240 = vld [vmem:[%s199 + $0x18] sm:$0xff]
        %v241 = vld [vmem:[%s199 + $0x20] sm:$0xff]
        %v242 = vld [vmem:[%s199 + $0x28] sm:$0xff]
        %v243 = vld [vmem:[%s199 + $0x30] sm:$0xff]
        %v244 = vld [vmem:[%s199 + $0x38] sm:$0xff]
        %v245 = vmul.f32 %v237, %v237
        %v246 = vmul.f32 %v238, %v238
        %v247 = vmul.f32 %v239, %v239
        %v248 = vmul.f32 %v240, %v240
        %v249 = vmul.f32 %v241, %v241
        %v250 = vmul.f32 %v242, %v242
        %v251 = vmul.f32 %v243, %v243
        %v252 = vmul.f32 %v244, %v244
        %v253 = vadd.f32 %v245, %v247
        %v254 = vadd.f32 %v253, %v249
        %v255 = vadd.f32 %v254, %v251
        %v256 = vrot.slane %v255, 4
        %v257 = vadd.f32 %v255, %v256
        %v258 = vrot.slane %v257, 2
        %v259 = vadd.f32 %v257, %v258
        %v260 = vrot.slane %v259, 1
        %v261 = vadd.f32 %v259, %v260
        %v262 = vadd.f32 %v246, %v248
        %v263 = vadd.f32 %v262, %v250
        %v264 = vadd.f32 %v263, %v252
        %v265 = vrot.slane %v264, 4
        %v266 = vadd.f32 %v264, %v265
        %v267 = vrot.slane %v266, 2
        %v268 = vadd.f32 %v266, %v267
        %v269 = vrot.slane %v268, 1
        %v270 = vadd.f32 %v268, %v269
        %vm271 = vcmask 1040384
        %v272 = vsel %vm271, %v261, 1.0
        %v273 = vsel %vm271, %v270, 1.0
        %v274 = vld [vmem:[#allocation6] sm:$0xff]
        %vm275 = vcmask 277504
        %v277 = vsel %vm275, %v274, 0
        %vm279 = vcmask 1041408
        %v281 = vsel %vm279, %v272, 0
        %v284 = vsel %vm279, %v273, 0
        %286 = vmatprep.subr.mxu0 %v238
        %287 = vmatpush1.msra.mxu0 %v237
        %288 = vmatprep.subr.mxu0 %v240
        %289 = vmatpush1.msra.mxu0 %v239
        %290 = vmatprep.subr.mxu0 %v242
        %291 = vmatpush1.msra.mxu0 %v241
        %292 = vmatprep.subr.mxu0 %v244
        %293 = vmatpush1.msra.mxu0 %v243
        %294 = vmatprep.subr.mxu0 %v284
        %295 = vmatpush1.msra.mxu0 %v281
        %296 = vmatprep.subr.mxu0 0.0
        %297 = vmatpush1.msra.mxu0 0.0
        %298 = vmatprep.subr.mxu0 0.0
        %299 = vmatpush1.msra.mxu0 0.0
        %300 = vmatprep.subr.mxu0 0.0
        %301 = vmatpush1.msra.mxu0 0.0
        %302 = vmatprep.subr.mxu0 0.0
        %303 = vmatpush1.msra.mxu0 0.0
        %304 = vmatprep.subr.mxu0 0.0
        %305 = vmatpush1.msra.mxu0 0.0
        %306 = vmatprep.subr.mxu0 0.0
        %307 = vmatpush1.msra.mxu0 0.0
        %308 = vmatprep.subr.mxu0 0.0
        %309 = vmatpush1.msra.mxu0 0.0
        %310 = vmatprep.subr.mxu0 0.0
        %311 = vmatpush1.msra.mxu0 0.0
        %312 = vmatprep.subr.mxu0 0.0
        %313 = vmatpush1.msra.mxu0 0.0
        %314 = vmatprep.subr.mxu0 0.0
        %315 = vmatpush1.msra.mxu0 0.0
        %316 = vmatprep.subr.mxu0 0.0
        %317 = vmatpush1.msra.mxu0 0.0
        %318 = vmatprep.subr.mxu0 0.0
        %319 = vmatpush1.msra.mxu0 0.0
        %320 = vmatprep.subr.mxu0 0.0
        %321 = vmatpush1.msra.mxu0 0.0
        %322 = vmatprep.subr.mxu0 0.0
        %323 = vmatpush1.msra.mxu0 0.0
        %324 = vmatprep.subr.mxu0 0.0
        %325 = vmatpush1.msra.mxu0 0.0
        %326 = vmatprep.subr.mxu0 0.0
        %327 = vmatpush1.msra.mxu0 0.0
        %328 = vmatprep.subr.mxu0 0.0
        %329 = vmatpush1.msra.mxu0 0.0
        %330 = vmatprep.subr.mxu0 0.0
        %331 = vmatpush1.msra.mxu0 0.0
        %332 = vmatprep.subr.mxu0 0.0
        %333 = vmatpush1.msra.mxu0 0.0
        %334 = vmatprep.subr.mxu0 0.0
        %335 = vmatpush1.msra.mxu0 0.0
        %336 = vmatprep.subr.mxu0 0.0
        %337 = vmatpush1.msra.mxu0 0.0
        %338 = vmatprep.subr.mxu0 0.0
        %339 = vmatpush1.msra.mxu0 0.0
        %340 = vmatprep.subr.mxu0 0.0
        %341 = vmatpush1.msra.mxu0 0.0
        %342 = vmatprep.subr.mxu0 0.0
        %343 = vmatpush1.msra.mxu0 0.0
        %344 = vmatprep.subr.mxu0 0.0
        %345 = vmatpush1.msra.mxu0 0.0
        %346 = vmatprep.subr.mxu0 0.0
        %347 = vmatpush1.msra.mxu0 0.0
        %348 = vmatprep.subr.mxu0 0.0
        %349 = vmatpush1.msra.mxu0 0.0
        %350 = vmatprep.mubr.f32.mxu0 0.0
        %351 = vmatmul.mubr.f32.gmra.mrb[0].mxu0 %v277
        %v352 = vpop.f32.mrb[0].mxu0
        %v353 = vadd.f32 0.0, %v352
        %v354 = vpop.f32.mrb[0].mxu0
        %v355 = vadd.f32 0.0, %v354
        %356 = vdwg.mxu0
        %v357 = vrot.slane %v353, 4
        %v358 = vmax.f32 %v353, %v357
        %v359 = vrot.slane %v358, 2
        %v360 = vmax.f32 %v358, %v359
        %v361 = vrot.slane %v360, 1
        %v362 = vmax.f32 %v360, %v361
        %v363 = vrot.slane %v355, 4
        %v364 = vmax.f32 %v355, %v363
        %v365 = vrot.slane %v364, 2
        %v366 = vmax.f32 %v364, %v365
        %v367 = vrot.slane %v366, 1
        %v368 = vmax.f32 %v366, %v367
        %v369 = vsub.f32 %v353, %v362
        %v370 = vsub.f32 %v355, %v368
        %v371 = vmul.f32 %v369, 1.442695
        %v372 = vpow.pop %v371
        %v373 = vmul.f32 %v370, 1.442695
        %v374 = vpow.pop %v373
        %v375 = vrot.slane %v372, 4
        %v376 = vadd.f32 %v372, %v375
        %v377 = vrot.slane %v376, 2
        %v378 = vadd.f32 %v376, %v377
        %v379 = vrot.slane %v378, 1
        %v380 = vadd.f32 %v378, %v379
        %v381 = vrot.slane %v374, 4
        %v382 = vadd.f32 %v374, %v381
        %v383 = vrot.slane %v382, 2
        %v384 = vadd.f32 %v382, %v383
        %v385 = vrot.slane %v384, 1
        %v386 = vadd.f32 %v384, %v385
        %v387 = vrcp.pop %v380
        %v388 = vmul.f32 1.0, %v387
        %v389 = vrcp.pop %v386
        %v390 = vmul.f32 1.0, %v389
        %v391 = vmul.f32 %v372, %v388
        %v392 = vmul.f32 %v374, %v390
        %v393 = vld [vmem:[#allocation2] sm:$0xff]
        %394 = vmatprep.subr.mxu0 %v238
        %395 = vmatpush1.xpose.msra.mxu0 %v237
        %396 = vmatprep.subr.mxu0 %v240
        %397 = vmatpush1.xpose.msra.mxu0 %v239
        %398 = vmatprep.subr.mxu0 %v242
        %399 = vmatpush1.xpose.msra.mxu0 %v241
        %400 = vmatprep.subr.mxu0 %v244
        %401 = vmatpush1.xpose.msra.mxu0 %v243
        %402 = vmatprep.subr.mxu0 %v273
        %403 = vmatpush1.xpose.msra.mxu0 %v272
        %404 = vmatprep.subr.mxu0 0.0
        %405 = vmatpush1.xpose.msra.mxu0 0.0
        %406 = vmatprep.subr.mxu0 0.0
        %407 = vmatpush1.xpose.msra.mxu0 0.0
        %408 = vmatprep.subr.mxu0 0.0
        %409 = vmatpush1.xpose.msra.mxu0 0.0
        %410 = vmatprep.subr.mxu0 0.0
        %411 = vmatpush1.xpose.msra.mxu0 0.0
        %412 = vmatprep.subr.mxu0 0.0
        %413 = vmatpush1.xpose.msra.mxu0 0.0
        %414 = vmatprep.subr.mxu0 0.0
        %415 = vmatpush1.xpose.msra.mxu0 0.0
        %416 = vmatprep.subr.mxu0 0.0
        %417 = vmatpush1.xpose.msra.mxu0 0.0
        %418 = vmatprep.subr.mxu0 0.0
        %419 = vmatpush1.xpose.msra.mxu0 0.0
        %420 = vmatprep.subr.mxu0 0.0
        %421 = vmatpush1.xpose.msra.mxu0 0.0
        %422 = vmatprep.subr.mxu0 0.0
        %423 = vmatpush1.xpose.msra.mxu0 0.0
        %424 = vmatprep.subr.mxu0 0.0
        %425 = vmatpush1.xpose.msra.mxu0 0.0
        %426 = vmatprep.subr.mxu0 0.0
        %427 = vmatpush1.xpose.msra.mxu0 0.0
        %428 = vmatprep.subr.mxu0 0.0
        %429 = vmatpush1.xpose.msra.mxu0 0.0
        %430 = vmatprep.subr.mxu0 0.0
        %431 = vmatpush1.xpose.msra.mxu0 0.0
        %432 = vmatprep.subr.mxu0 0.0
        %433 = vmatpush1.xpose.msra.mxu0 0.0
        %434 = vmatprep.subr.mxu0 0.0
        %435 = vmatpush1.xpose.msra.mxu0 0.0
        %436 = vmatprep.subr.mxu0 0.0
        %437 = vmatpush1.xpose.msra.mxu0 0.0
        %438 = vmatprep.subr.mxu0 0.0
        %439 = vmatpush1.xpose.msra.mxu0 0.0
        %440 = vmatprep.subr.mxu0 0.0
        %441 = vmatpush1.xpose.msra.mxu0 0.0
        %442 = vmatprep.subr.mxu0 0.0
        %443 = vmatpush1.xpose.msra.mxu0 0.0
        %444 = vmatprep.subr.mxu0 0.0
        %445 = vmatpush1.xpose.msra.mxu0 0.0
        %446 = vmatprep.subr.mxu0 0.0
        %447 = vmatpush1.xpose.msra.mxu0 0.0
        %448 = vmatprep.subr.mxu0 0.0
        %449 = vmatpush1.xpose.msra.mxu0 0.0
        %450 = vmatprep.subr.mxu0 0.0
        %451 = vmatpush1.xpose.msra.mxu0 0.0
        %452 = vmatprep.subr.mxu0 0.0
        %453 = vmatpush1.xpose.msra.mxu0 0.0
        %454 = vmatprep.subr.mxu0 0.0
        %455 = vmatpush1.xpose.msra.mxu0 0.0
        %456 = vmatprep.subr.mxu0 0.0
        %457 = vmatpush1.xpose.msra.mxu0 0.0
        %458 = vmatprep.mubr.f32.mxu0 %v392
        %459 = vmatmul.mubr.f32.gmra.mrb[0].mxu0 %v391
        %v460 = vpop.f32.mrb[0].mxu0
        %v461 = vadd.f32 0.0, %v460
        %v462 = vpop.f32.mrb[0].mxu0
        %463 = vdwg.mxu0
        %v464 = vadd.f32 %v393, %v461
        %465 = vst.msk [vmem:[#allocation2] sm:$0xff] %vm275, %v464
        // Predicated region
        $region49: #{tpu_custom_call.1} parent=31 // pred_check
          %p466 = pneg %p231
        $region50: #{tpu_custom_call.1} parent=31 // pred_check_branch
          %468 = sbr.rel (%p466) target = $region52
        $region51: #{tpu_custom_call.1} parent=31 // pred_region
          %v469 = vld [vmem:[#allocation2] sm:$0xff]
          %v470 = vld [vmem:[#allocation8] sm:$0xff]
          %472 = vset.pattern.permute.xlu0 33
          %473 = vperm.xlu0 %472, %v469
          %v474 = vpop.permute.xlu0 %473
          %v476 = vmul.f32 %v474, %v470
          %v477 = vsub.f32 %v469, %v476
          %vm478 = vcmask 261120
          %479 = vst.msk [vmem:[%s229] sm:$0xff] %vm478, %v477
        $region52: #{tpu_custom_call.1} parent=31 // pred_fallthru
          _
        %s480 = sand.u32 %s111, 1
        %s481 = scalar_lea.sflag [#allocation5], %s480
        %s482 = sand.u32 %s111, 1
        %s483 = smul.addr %s482, 8
        %s484 = scalar_lea.vmem [#allocation9], %s483
        // Predicated region
        $region53: #{tpu_custom_call.1} parent=31 // pred_check
          %p485 = pneg %p121
        $region54: #{tpu_custom_call.1} parent=31 // pred_check_branch
          %487 = sbr.rel (%p485) target = $region56
        $region55: #{tpu_custom_call.1} parent=31 // pred_region
          %s489 = ssub.s32 128, 128
          %490 = vsyncadd %s481, %s489
          %s491 = smul.addr %s25, 128
          %s492 = scalar_lea.hbm %s3, %s491
          %s494 = sshll.u32 %s484, 4
          %s495 = int_to_ptr.vmem [resolvable:$true] %s494
          %497 = dma.vmem_to_hbm [thread:$0]  %s495, 128, %s492, %s481
        $region56: #{tpu_custom_call.1} parent=31 // pred_fallthru
          _
      $region32: #{tpu_custom_call.1} parent=5 // pred_fallthru
        _
      %p498 = scmp.le.s32.totalorder 2, %s16
      // Predicated region
      $region57: #{tpu_custom_call.1} parent=5 // pred_check
        %p499 = pneg %p498
      $region58: #{tpu_custom_call.1} parent=5 // pred_check_branch
        %501 = sbr.rel (%p499) target = $region60
      $region59: #{tpu_custom_call.1} parent=5 // pred_region
        %s502 = ssub.s32 %s16, 2
        // Predicated region
        $region61: #{tpu_custom_call.1} parent=59 // pred_check
          %p503 = pneg %p127
        $region62: #{tpu_custom_call.1} parent=59 // pred_check_branch
          %505 = sbr.rel (%p503) target = $region64
        $region63: #{tpu_custom_call.1} parent=59 // pred_region
          %s506 = sand.u32 %s112, 1
          %s507 = scalar_lea.sflag [#allocation5], %s506
          %s508 = sand.u32 %s112, 1
          %s509 = smul.addr %s508, 8
          %s510 = scalar_lea.vmem [#allocation9], %s509
          %511 = dma.done %s507, 128
        $region64: #{tpu_custom_call.1} parent=59 // pred_fallthru
          _
      $region60: #{tpu_custom_call.1} parent=5 // pred_fallthru
        _
    $region6: #{tpu_custom_call.1} parent=1 // loop_footer
      %s20 = sadd.s32 1, %s16
    $region7: #{tpu_custom_call.1} parent=1 // loop_footer_branch
      %15 = sbr.rel target = $region3
    $region8: #{tpu_custom_call.1} parent=1 // loop_exit
      _
    %512 = vsyncpa [#allocation4], 1
    %s513 = scalar_lea.sflag [#allocation4], 1
    %514 = vsyncpa %s513, 1
    %515 = vsyncpa [#allocation7], 1
    %516 = vsyncpa [#allocation5], 1
    %s517 = scalar_lea.sflag [#allocation5], 1
    %518 = vsyncpa %s517, 1

</llo_original>
